<compile_context>
chip_gen: v7x
topology: tpu7x:2x2x1
jax: 0.10.0
libtpu: 0.0.40
codegen_flags: <defaults>
</compile_context>

<pallas_src>
import functools

import jax
import jax.numpy as jnp
from jax import lax
from jax.experimental import pallas as pl
from jax.experimental.pallas import tpu as pltpu


def _simple_rmsnorm_kernel(x_ref, o_ref, *, scale, eps, group, dim):
    """x_ref/o_ref: (block_rows, group*dim) tiles. Each `dim`-wide lane segment
    is one logical row and is normalized independently."""
    xf = x_ref[...].astype(jnp.float32)
    eps2 = eps * eps
    outs = []
    for j in range(group):  # group is a small static int (<= 16)
        seg = xf[:, j * dim:(j + 1) * dim]                    # (br, dim)
        ss = jnp.sum(seg * seg, axis=-1, keepdims=True)       # (br, 1), f32
        # out = x / max(||x||, eps) * sqrt(dim)
        #     = x * scale * rsqrt(max(ss, eps^2))      (sqrt is monotonic)
        inv = scale * lax.rsqrt(jnp.maximum(ss, eps2))        # EUP rsqrt
        outs.append(seg * inv)
    out = outs[0] if group == 1 else jnp.concatenate(outs, axis=-1)
    o_ref[...] = out.astype(o_ref.dtype)


def _pick_block_rows(rows, packed_dim, itemsize):
    """Largest sublane-aligned row tile, targeting ~4 MiB per input tile."""
    sublane = {4: 8, 2: 16, 1: 32}.get(itemsize, 8)
    target_tile_bytes = 4 * 1024 * 1024      # byte-based cap (no fixed row cap)
    row_bytes = max(packed_dim * itemsize, 1)
    br = max(sublane, target_tile_bytes // row_bytes)
    br = (br // sublane) * sublane           # align to the dtype sublane tile
    if br >= rows:
        return rows                          # single block == full array (legal, no masking)
    return br


def simple_rms_norm(x, *, block_rows=None):
    """Applies SimpleRMSNorm over the last axis of `x`."""
    orig_shape = x.shape
    dim = orig_shape[-1]
    scale = float(dim) ** 0.5
    eps = 1e-12

    # Flatten all leading axes into rows (metadata-only for contiguous arrays).
    x2d = x.reshape(-1, dim)
    rows = x2d.shape[0]
    itemsize = jnp.dtype(x.dtype).itemsize

    # Lane-dense repack: fold `group` logical rows into one physical row so the
    # kernel's last (lane) dim is a multiple of 128 -> dense stores & DMA.
    group = 1
    if 8 <= dim < 128 and 128 % dim == 0:
        g = 128 // dim
        if g > 1 and rows % g == 0:
            group = g
    # TODO(synk): dims needing lcm-style packing (128 % dim != 0), dim < 8, or
    # rows not divisible by the group fall back to the masked-store path.

    packed_dim = group * dim
    packed_rows = rows // group
    xp = x2d.reshape(packed_rows, packed_dim)

    if block_rows is None:
        block_rows = _pick_block_rows(packed_rows, packed_dim, itemsize)

    grid = (pl.cdiv(packed_rows, block_rows),)

    # VMEM budget: in + out tiles double-buffered, f32 intermediates
    # single-buffered, plus headroom.  Clamp to 48 MiB (fits v7x's 64 MiB).
    block_bytes = block_rows * packed_dim * itemsize
    f32_block_bytes = block_rows * packed_dim * 4
    vmem_limit = 4 * block_bytes + 3 * f32_block_bytes + (4 << 20)
    vmem_limit = min(max(vmem_limit, 16 << 20), 48 << 20)
    # TODO(synk): for extreme dim (>~390K f32) even one sublane-tall block blows
    # this budget; would need a second 'arbitrary' grid axis over dim with an
    # ss accumulator in VMEM scratch plus a finalize scaling pass.

    cost = pl.CostEstimate(
        flops=3 * rows * dim,
        transcendentals=rows,
        bytes_accessed=2 * rows * dim * itemsize,
    )

    out_p = pl.pallas_call(
        functools.partial(_simple_rmsnorm_kernel, scale=scale, eps=eps,
                          group=group, dim=dim),
        out_shape=jax.ShapeDtypeStruct((packed_rows, packed_dim), x.dtype),
        grid_spec=pltpu.PrefetchScalarGridSpec(
            num_scalar_prefetch=0,
            grid=grid,
            in_specs=[pl.BlockSpec((block_rows, packed_dim), lambda i: (i, 0))],
            out_specs=pl.BlockSpec((block_rows, packed_dim), lambda i: (i, 0)),
        ),
        compiler_params=pltpu.CompilerParams(
            # TODO(synk): on v7x, verify in a profile that this parallel row
            # axis is sharded across both TensorCores; if not, add a leading
            # CORE_PARALLEL axis of size 2 and split the row range explicitly.
            dimension_semantics=("parallel",),
            vmem_limit_bytes=vmem_limit,
        ),
        cost_estimate=cost,
    )(xp)

    return out_p.reshape(orig_shape)


def _reference(x):
    x32 = x.astype(jnp.float32)
    dim = x.shape[-1]
    norm = jnp.sqrt(jnp.sum(x32 * x32, axis=-1, keepdims=True))
    return (x32 / jnp.maximum(norm, 1e-12) * (dim ** 0.5)).astype(x.dtype)


if __name__ == "__main__":
    key = jax.random.PRNGKey(0)
    batch, seq, hidden = 2, 8, 32
    x = jax.random.normal(key, (batch, seq, hidden), dtype=jnp.float32)

    # Packed (lane-dense) path: dim=32 -> group=4, packed last dim = 128.
    out = jax.block_until_ready(simple_rms_norm(x))
    ref = _reference(x)
    assert out.shape == x.shape
    assert out.dtype == x.dtype
    assert jnp.allclose(out, ref, atol=1e-5, rtol=1e-5), "mismatch (packed f32)"

    # Unpacked path (dim >= 128).
    x2 = jax.random.normal(jax.random.PRNGKey(1), (2, 8, 256), dtype=jnp.float32)
    out2 = jax.block_until_ready(simple_rms_norm(x2))
    assert jnp.allclose(out2, _reference(x2), atol=1e-5, rtol=1e-5), \
        "mismatch (unpacked f32)"

    # bf16 input: compute in f32, single cast at the store.
    xb = jax.random.normal(jax.random.PRNGKey(2), (2, 8, 32), dtype=jnp.bfloat16)
    outb = jax.block_until_ready(simple_rms_norm(xb))
    refb = _reference(xb)
    assert outb.dtype == jnp.bfloat16
    assert jnp.allclose(outb.astype(jnp.float32), refb.astype(jnp.float32),
                        atol=2e-2, rtol=2e-2), "mismatch (packed bf16)"

    print("KERNEL_OK")
</pallas_src>

<mosaic_0001>
module attributes {stable_mosaic.version = 11 : i64} {
  func.func @_simple_rmsnorm_kernel(%arg0: i32, %arg1: memref<4x128xf32, #tpu.memory_space<vmem>>, %arg2: memref<4x128xf32, #tpu.memory_space<vmem>>) attributes {dimension_semantics = [#tpu.dimension_semantics<parallel>], iteration_bounds = array<i64: 1>, scalar_prefetch = 0 : i64, scratch_operands = 0 : i64, tpu.core_type = #tpu.core_type<tc>, window_params = [{transform_indices = @transform_0, window_bounds = array<i64: 4, 128>}, {transform_indices = @transform_1, window_bounds = array<i64: 4, 128>}]} {
    %c0 = arith.constant 0 : index
    %c0_0 = arith.constant 0 : index
    %0 = vector.load %arg1[%c0, %c0_0] : memref<4x128xf32, #tpu.memory_space<vmem>>, vector<4x128xf32>
    %1 = vector.extract_strided_slice %0 {offsets = [0, 0], sizes = [4, 32], strides = [1, 1]} : vector<4x128xf32> to vector<4x32xf32>
    %2 = arith.mulf %1, %1 : vector<4x32xf32>
    %cst = arith.constant dense<0.000000e+00> : vector<4xf32>
    %3 = vector.multi_reduction <add>, %2, %cst [1] : vector<4x32xf32> to vector<4xf32>
    %4 = vector.shape_cast %3 : vector<4xf32> to vector<4x1xf32>
    %cst_1 = arith.constant 1.000000e-24 : f32
    %5 = vector.broadcast %cst_1 : f32 to vector<4x1xf32>
    %6 = arith.maximumf %4, %5 : vector<4x1xf32>
    %7 = math.rsqrt %6 : vector<4x1xf32>
    %cst_2 = arith.constant 5.65685415 : f32
    %8 = vector.broadcast %cst_2 : f32 to vector<4x1xf32>
    %9 = arith.mulf %8, %7 : vector<4x1xf32>
    %10 = vector.broadcast %9 : vector<4x1xf32> to vector<4x32xf32>
    %11 = arith.mulf %1, %10 : vector<4x32xf32>
    %12 = vector.extract_strided_slice %0 {offsets = [0, 32], sizes = [4, 32], strides = [1, 1]} : vector<4x128xf32> to vector<4x32xf32>
    %13 = arith.mulf %12, %12 : vector<4x32xf32>
    %cst_3 = arith.constant dense<0.000000e+00> : vector<4xf32>
    %14 = vector.multi_reduction <add>, %13, %cst_3 [1] : vector<4x32xf32> to vector<4xf32>
    %15 = vector.shape_cast %14 : vector<4xf32> to vector<4x1xf32>
    %cst_4 = arith.constant 1.000000e-24 : f32
    %16 = vector.broadcast %cst_4 : f32 to vector<4x1xf32>
    %17 = arith.maximumf %15, %16 : vector<4x1xf32>
    %18 = math.rsqrt %17 : vector<4x1xf32>
    %cst_5 = arith.constant 5.65685415 : f32
    %19 = vector.broadcast %cst_5 : f32 to vector<4x1xf32>
    %20 = arith.mulf %19, %18 : vector<4x1xf32>
    %21 = vector.broadcast %20 : vector<4x1xf32> to vector<4x32xf32>
    %22 = arith.mulf %12, %21 : vector<4x32xf32>
    %23 = vector.extract_strided_slice %0 {offsets = [0, 64], sizes = [4, 32], strides = [1, 1]} : vector<4x128xf32> to vector<4x32xf32>
    %24 = arith.mulf %23, %23 : vector<4x32xf32>
    %cst_6 = arith.constant dense<0.000000e+00> : vector<4xf32>
    %25 = vector.multi_reduction <add>, %24, %cst_6 [1] : vector<4x32xf32> to vector<4xf32>
    %26 = vector.shape_cast %25 : vector<4xf32> to vector<4x1xf32>
    %cst_7 = arith.constant 1.000000e-24 : f32
    %27 = vector.broadcast %cst_7 : f32 to vector<4x1xf32>
    %28 = arith.maximumf %26, %27 : vector<4x1xf32>
    %29 = math.rsqrt %28 : vector<4x1xf32>
    %cst_8 = arith.constant 5.65685415 : f32
    %30 = vector.broadcast %cst_8 : f32 to vector<4x1xf32>
    %31 = arith.mulf %30, %29 : vector<4x1xf32>
    %32 = vector.broadcast %31 : vector<4x1xf32> to vector<4x32xf32>
    %33 = arith.mulf %23, %32 : vector<4x32xf32>
    %34 = vector.extract_strided_slice %0 {offsets = [0, 96], sizes = [4, 32], strides = [1, 1]} : vector<4x128xf32> to vector<4x32xf32>
    %35 = arith.mulf %34, %34 : vector<4x32xf32>
    %cst_9 = arith.constant dense<0.000000e+00> : vector<4xf32>
    %36 = vector.multi_reduction <add>, %35, %cst_9 [1] : vector<4x32xf32> to vector<4xf32>
    %37 = vector.shape_cast %36 : vector<4xf32> to vector<4x1xf32>
    %cst_10 = arith.constant 1.000000e-24 : f32
    %38 = vector.broadcast %cst_10 : f32 to vector<4x1xf32>
    %39 = arith.maximumf %37, %38 : vector<4x1xf32>
    %40 = math.rsqrt %39 : vector<4x1xf32>
    %cst_11 = arith.constant 5.65685415 : f32
    %41 = vector.broadcast %cst_11 : f32 to vector<4x1xf32>
    %42 = arith.mulf %41, %40 : vector<4x1xf32>
    %43 = vector.broadcast %42 : vector<4x1xf32> to vector<4x32xf32>
    %44 = arith.mulf %34, %43 : vector<4x32xf32>
    %45 = tpu.concatenate %11, %22, %33, %44 in 1 : vector<4x32xf32>, vector<4x32xf32>, vector<4x32xf32>, vector<4x32xf32> -> vector<4x128xf32>
    %c0_12 = arith.constant 0 : index
    %c0_13 = arith.constant 0 : index
    %46 = vector.load %arg2[%c0_12, %c0_13] : memref<4x128xf32, #tpu.memory_space<vmem>>, vector<4x128xf32>
    tpu.vector_store %arg2[%c0_12, %c0_13], %45 {strides = array<i32>} : memref<4x128xf32, #tpu.memory_space<vmem>>, vector<4x128xf32>,
    return
  }
  func.func @transform_0(%arg0: i32) -> (i32, i32) {
    %c0_i32 = arith.constant 0 : i32
    %c0_i32_0 = arith.constant 0 : i32
    return %arg0, %c0_i32 : i32, i32
  }
  func.func @transform_1(%arg0: i32) -> (i32, i32) {
    %c0_i32 = arith.constant 0 : i32
    %c0_i32_0 = arith.constant 0 : i32
    return %arg0, %c0_i32 : i32, i32
  }
}

</mosaic_0001>

<llo_original>
// kernel: tpu_custom_call.1
$region0: #{tpu_custom_call.1}
  #allocation0 [shape = 'u32[]', space=smem, size = 0x4, offset = 0x4, fixed_abs, tag = 'smem constant byte address 0x4 - core index']
  #allocation1 [shape = 'u32[144,128]{1,0:T(1,128)}', space=vmem, size = 0x12000, scoped, tag = 'internal scratch']
  %s0 = inlined_call_operand.hbm [shape: f32[4,128], index: 0, kind: input, shape index: {}]
  %s1 = inlined_call_operand.hbm [shape: f32[4,128], index: 1, kind: output, shape index: {}]
  %s2 = sld [smem:[#allocation0]]
  $region18: #{tpu_custom_call.1} parent=0
    _
  %s4 = ssub.s32 1, %s2
  %s5 = scalar_select 0, %s4, %s2
  $region1: #{tpu_custom_call.1} parent=0
    #allocation2 [shape = 'u8[2048]{0}', space=vmem, size = 0x800, scoped, tag = 'input window, operand 0, single buffered']
    #allocation3 [shape = 's32[1]{0}', space=sflag, size = 0x4, scoped, tag = 'scoped memory for tpu_custom_call.1']
    #allocation4 [shape = 's32[1]{0}', space=sflag, size = 0x4, scoped, tag = 'scoped memory for tpu_custom_call.1']
    #allocation5 [shape = 'u8[2048]{0}', space=vmem, size = 0x800, scoped, tag = 'output window, operand 0, single buffered']
    %6 = vsyncpa [#allocation3], 0
    %7 = vsyncpa [#allocation4], 0
    // Predicated region
    $region2: #{tpu_custom_call.1} parent=1 // pred_check
      _
    $region3: #{tpu_custom_call.1} parent=1 // pred_check_branch
      %9 = sbr.rel (0) target = $region5
    $region4: #{tpu_custom_call.1} parent=1 // pred_region
      %s11 = ssub.s32 64, 64
      %12 = vsyncadd [#allocation3], %s11
      %s14 = sshll.u32 [#allocation2], 4
      %s15 = int_to_ptr.vmem [resolvable:$true] %s14
      %17 = dma.hbm_to_vmem [thread:$0]  %s0, 64, %s15, [#allocation3]
    $region5: #{tpu_custom_call.1} parent=1 // pred_fallthru
      _
    // Predicated region
    $region6: #{tpu_custom_call.1} parent=1 // pred_check
      _
    $region7: #{tpu_custom_call.1} parent=1 // pred_check_branch
      %19 = sbr.rel (0) target = $region9
    $region8: #{tpu_custom_call.1} parent=1 // pred_region
      %20 = dma.done [#allocation3], 64
    $region9: #{tpu_custom_call.1} parent=1 // pred_fallthru
      _
    %v21 = vld [vmem:[#allocation2] sm:$0xf]
    %v22 = vmul.f32 %v21, %v21
    %vm23 = vcmask 257024
    %v24 = vsel %vm23, %v22, 0.0
    %25 = vadd.xlane.f32.xlu0 %v24
    %v26 = vpop.xlane.xlu0 %25
    %v27 = vmax.f32 %v26, 1e-24
    %v28 = vrsqrt.pop %v27
    %v29 = vmul.f32 %v28, 5.656854
    %v30 = vmul.f32 %v21, %v29
    %32 = vrot.lane.b32.xlu0 %v22, 96
    %v33 = vpop.permute.xlu0 %32
    %v35 = vsel %vm23, %v33, 0.0
    %36 = vadd.xlane.f32.xlu0 %v35
    %v37 = vpop.xlane.xlu0 %36
    %v38 = vmax.f32 %v37, 1e-24
    %v39 = vrsqrt.pop %v38
    %v40 = vmul.f32 %v39, 5.656854
    %v41 = vmul.f32 %v21, %v40
    %42 = vrot.lane.b32.xlu0 %v22, 64
    %v43 = vpop.permute.xlu0 %42
    %v45 = vsel %vm23, %v43, 0.0
    %46 = vadd.xlane.f32.xlu0 %v45
    %v47 = vpop.xlane.xlu0 %46
    %v48 = vmax.f32 %v47, 1e-24
    %v49 = vrsqrt.pop %v48
    %v50 = vmul.f32 %v49, 5.656854
    %v51 = vmul.f32 %v21, %v50
    %52 = vrot.lane.b32.xlu0 %v22, 32
    %v53 = vpop.permute.xlu0 %52
    %v55 = vsel %vm23, %v53, 0.0
    %56 = vadd.xlane.f32.xlu0 %v55
    %v57 = vpop.xlane.xlu0 %56
    %v58 = vmax.f32 %v57, 1e-24
    %v59 = vrsqrt.pop %v58
    %v60 = vmul.f32 %v59, 5.656854
    %v61 = vmul.f32 %v21, %v60
    %vm62 = vcmask 261120
    %v63 = vsel %vm62, %v30, %v41
    %vm64 = vcmask 523264
    %v65 = vsel %vm64, %v63, %v51
    %vm66 = vcmask 785408
    %v67 = vsel %vm66, %v65, %v61
    %68 = vst [vmem:[#allocation5] sm:$0xf] %v67
    // Predicated region
    $region10: #{tpu_custom_call.1} parent=1 // pred_check
      _
    $region11: #{tpu_custom_call.1} parent=1 // pred_check_branch
      %70 = sbr.rel (0) target = $region13
    $region12: #{tpu_custom_call.1} parent=1 // pred_region
      %s72 = ssub.s32 64, 64
      %73 = vsyncadd [#allocation4], %s72
      %s75 = sshll.u32 [#allocation5], 4
      %s76 = int_to_ptr.vmem [resolvable:$true] %s75
      %78 = dma.vmem_to_hbm [thread:$0]  %s76, 64, %s1, [#allocation4]
    $region13: #{tpu_custom_call.1} parent=1 // pred_fallthru
      _
    // Predicated region
    $region14: #{tpu_custom_call.1} parent=1 // pred_check
      _
    $region15: #{tpu_custom_call.1} parent=1 // pred_check_branch
      %80 = sbr.rel (0) target = $region17
    $region16: #{tpu_custom_call.1} parent=1 // pred_region
      %81 = dma.done [#allocation4], 64
    $region17: #{tpu_custom_call.1} parent=1 // pred_fallthru
      _
    %82 = vsyncpa [#allocation3], 1
    %83 = vsyncpa [#allocation4], 1

</llo_original>
